<compile_context>
chip_gen: v6e
topology: v6e:2x2x1
jax: 0.10.0
libtpu: 0.0.40
codegen_flags: <defaults>
</compile_context>

<pallas_src>
import numpy as np
import jax
import jax.numpy as jnp
from jax.experimental import pallas as pl
from jax.experimental.pallas import tpu as pltpu

# Constants from MRRWeightBank.__init__ defaults (deterministic "parameters").
WL_MIN = 1.53e-06
WL_MAX = 1.57e-06
COUPLING = 0.5          # coupling_strength passed to each MicroringResonator
Q_FACTOR = 15000.0      # q_factor passed to each MicroringResonator


# ----------------------------------------------------------------------------------
# Helpers
# ----------------------------------------------------------------------------------
def _round_up(x, m):
    return (x + m - 1) // m * m


def _pick_wavelength_tile(n_wl_pad):
    # n_wl_pad is a multiple of 128; pick the largest of {512, 256, 128} that divides it.
    for tw in (512, 256, 128):
        if n_wl_pad % tw == 0:
            return tw
    return 128  # unreachable


def make_ring_centers(n_inputs, n_outputs):
    """center_wl[i, j] = wl_min + (wl_max - wl_min) * (i*n_in + j) / (n_in*n_out)."""
    i = jnp.arange(n_outputs, dtype=jnp.float32)[:, None]
    j = jnp.arange(n_inputs, dtype=jnp.float32)[None, :]
    idx = i * n_inputs + j
    return WL_MIN + (WL_MAX - WL_MIN) * idx / float(n_inputs * n_outputs)


# ----------------------------------------------------------------------------------
# One-shot kernel: build the drop-port transmission bank (the "weight matrix").
# Runs once per (centers, wavelength grid); divisions are hoisted to n_out*n_in
# (inv_half_fwhm is precomputed), one exact reciprocal per ring/wavelength remains.
# ----------------------------------------------------------------------------------
def _drop_transmission_kernel(centers_ref, inv_hf_ref, wl_ref, drop_ref):
    """centers_ref, inv_hf_ref: (n_out, n_in)  wl_ref: (1, TW)  drop_ref: (n_out, n_in, TW)."""
    centers = centers_ref[...]                                  # (n_out, n_in)
    inv_hf = inv_hf_ref[...]                                    # (n_out, n_in) = 2*Q/center
    wl = wl_ref[...]                                            # (1, TW)

    delta = wl[0][None, None, :] - centers[:, :, None]          # (n_out, n_in, TW)
    xnorm = delta * inv_hf[:, :, None]                          # no per-element divide
    drop_ref[...] = COUPLING / (1.0 + xnorm * xnorm)            # exact (one-time cost)


def compute_drop_bank(centers, wavelengths_padded):
    """centers (n_out, n_in), wavelengths_padded (n_wl_pad,) -> drop (n_out, n_in, n_wl_pad)."""
    n_out, n_in = centers.shape
    n_wl_pad = wavelengths_padded.shape[0]
    tw = _pick_wavelength_tile(n_wl_pad)
    num_w = n_wl_pad // tw

    inv_hf = (2.0 * Q_FACTOR) / centers                          # (n_out, n_in), tiny
    wl2d = wavelengths_padded.reshape(1, n_wl_pad).astype(jnp.float32)

    return pl.pallas_call(
        _drop_transmission_kernel,
        out_shape=jax.ShapeDtypeStruct((n_out, n_in, n_wl_pad), jnp.float32),
        grid_spec=pl.GridSpec(
            grid=(num_w,),
            in_specs=[
                pl.BlockSpec((n_out, n_in), lambda w: (0, 0)),       # shared, fetched once
                pl.BlockSpec((n_out, n_in), lambda w: (0, 0)),       # shared, fetched once
                pl.BlockSpec((1, tw), lambda w: (0, w)),             # wavelength tile
            ],
            out_specs=pl.BlockSpec((n_out, n_in, tw), lambda w: (0, 0, w)),
        ),
        compiler_params=pltpu.CompilerParams(
            dimension_semantics=("parallel",),
        ),
    )(centers.astype(jnp.float32), inv_hf.astype(jnp.float32), wl2d)


# ----------------------------------------------------------------------------------
# Per-forward kernel: out[b, i, w] = sum_j drop[i, j, w] * x[b, j, w]
# Accumulate-over-j VPU loop; live state is only the (TB, n_out, TW) accumulator.
# ----------------------------------------------------------------------------------
def _wdm_mvm_kernel(drop_ref, x_ref, o_ref):
    """drop_ref: (n_out, n_in, TW)  x_ref: (TB, n_in, TW)  o_ref: (TB, n_out, TW)."""
    n_in = x_ref.shape[1]
    x = x_ref[...]                                               # (TB, n_in, TW)
    drop = drop_ref[...]                                         # (n_out, n_in, TW)

    acc = jnp.zeros(o_ref.shape, jnp.float32)                    # (TB, n_out, TW)
    # Static (trace-time) unrolled loop over the small input index j: keeps the live
    # footprint at (TB, n_out, TW) and avoids the 4-D intermediate + XLU reduction.
    for j in range(n_in):
        x_j = x[:, j, :]                                         # (TB, TW)
        d_j = drop[:, j, :]                                      # (n_out, TW)
        acc = acc + x_j[:, None, :] * d_j[None, :, :]            # (TB, n_out, TW)
    o_ref[...] = acc


def mrr_weight_bank_forward(x, centers, wavelengths, *, batch_tile=8):
    """x: (B, n_inputs, n_wavelengths) f32 -> (B, n_outputs, n_wavelengths) f32."""
    B, n_in, n_wl = x.shape
    n_out = centers.shape[0]

    # Lane-dense layout: pad the wavelength axis to a multiple of 128 (avoids masked
    # partial stores); pad the batch axis to a multiple of the batch tile.
    n_wl_pad = _round_up(max(n_wl, 128), 128)
    tw = _pick_wavelength_tile(n_wl_pad)
    tb = min(batch_tile, B)
    b_pad = _round_up(B, tb)

    wl_p = jnp.pad(wavelengths.astype(jnp.float32), (0, n_wl_pad - n_wl), mode="edge")
    x_p = jnp.pad(x.astype(jnp.float32),
                  ((0, b_pad - B), (0, 0), (0, n_wl_pad - n_wl)))

    # One-time drop-port transmission bank (static w.r.t. the batch loop).
    drop = compute_drop_bank(centers.astype(jnp.float32), wl_p)   # (n_out, n_in, n_wl_pad)

    num_w = n_wl_pad // tw
    num_b = b_pad // tb

    out_p = pl.pallas_call(
        _wdm_mvm_kernel,
        out_shape=jax.ShapeDtypeStruct((b_pad, n_out, n_wl_pad), jnp.float32),
        grid_spec=pl.GridSpec(
            # Batch innermost: the shared drop block index is constant across it, so the
            # pipeliner keeps it resident instead of re-DMAing it every step.  Both axes
            # are independent ("parallel") -> megacore sharding on v7x.
            grid=(num_w, num_b),
            in_specs=[
                pl.BlockSpec((n_out, n_in, tw), lambda w, b: (0, 0, w)),  # drop (shared over b)
                pl.BlockSpec((tb, n_in, tw), lambda w, b: (b, 0, w)),     # x tile
            ],
            out_specs=pl.BlockSpec((tb, n_out, tw), lambda w, b: (b, 0, w)),
        ),
        compiler_params=pltpu.CompilerParams(
            dimension_semantics=("parallel", "parallel"),
            # NOTE: for large n_in/n_out/TW re-derive tile sizes against the VMEM ceiling
            # (v7x: 64 MiB physical / 32 MiB default scoped) and set vmem_limit_bytes.
        ),
    )(drop, x_p)

    return out_p[:B, :, :n_wl]


# ----------------------------------------------------------------------------------
# Pure-JAX reference (same math as the assumed MicroringResonator drop port).
# ----------------------------------------------------------------------------------
def reference_forward(x, centers, wavelengths):
    fwhm = centers / Q_FACTOR
    delta = wavelengths[None, None, :] - centers[:, :, None]
    drop = COUPLING / (1.0 + (2.0 * delta / fwhm[:, :, None]) ** 2)
    return jnp.einsum('bjw,ijw->biw', x, drop)


if __name__ == "__main__":
    n_inputs, n_outputs, n_wavelengths, batch = 4, 3, 8, 2

    key = jax.random.PRNGKey(0)
    # Non-negative optical input powers, shape (batch, n_inputs, n_wavelengths).
    x = jax.random.uniform(key, (batch, n_inputs, n_wavelengths), dtype=jnp.float32)

    centers = make_ring_centers(n_inputs, n_outputs)
    wavelengths = jnp.linspace(WL_MIN, WL_MAX, n_wavelengths, dtype=jnp.float32)

    out = mrr_weight_bank_forward(x, centers, wavelengths)
    out = jax.block_until_ready(out)

    ref = reference_forward(x, centers, wavelengths)
    assert out.shape == (batch, n_outputs, n_wavelengths)
    np.testing.assert_allclose(np.asarray(out), np.asarray(ref), rtol=1e-5, atol=1e-6)

    print("KERNEL_OK")
</pallas_src>

<mosaic_0001>
module attributes {stable_mosaic.version = 11 : i64} {
  func.func @_drop_transmission_kernel(%arg0: i32, %arg1: memref<3x4xf32, #tpu.memory_space<vmem>>, %arg2: memref<3x4xf32, #tpu.memory_space<vmem>>, %arg3: memref<1x128xf32, #tpu.memory_space<vmem>>, %arg4: memref<3x4x128xf32, #tpu.memory_space<vmem>>) attributes {dimension_semantics = [#tpu.dimension_semantics<parallel>], iteration_bounds = array<i64: 1>, scalar_prefetch = 0 : i64, scratch_operands = 0 : i64, tpu.core_type = #tpu.core_type<tc>, window_params = [{pipeline_mode = #tpu.pipeline_mode<synchronous>, transform_indices = @transform_0, window_bounds = array<i64: 3, 4>}, {pipeline_mode = #tpu.pipeline_mode<synchronous>, transform_indices = @transform_1, window_bounds = array<i64: 3, 4>}, {transform_indices = @transform_2, window_bounds = array<i64: 1, 128>}, {transform_indices = @transform_3, window_bounds = array<i64: 3, 4, 128>}]} {
    %c0 = arith.constant 0 : index
    %c0_0 = arith.constant 0 : index
    %0 = vector.load %arg1[%c0, %c0_0] : memref<3x4xf32, #tpu.memory_space<vmem>>, vector<3x4xf32>
    %c0_1 = arith.constant 0 : index
    %c0_2 = arith.constant 0 : index
    %1 = vector.load %arg2[%c0_1, %c0_2] : memref<3x4xf32, #tpu.memory_space<vmem>>, vector<3x4xf32>
    %c0_3 = arith.constant 0 : index
    %c0_4 = arith.constant 0 : index
    %2 = vector.load %arg3[%c0_3, %c0_4] : memref<1x128xf32, #tpu.memory_space<vmem>>, vector<1x128xf32>
    %3 = vector.shape_cast %2 : vector<1x128xf32> to vector<128xf32>
    %4 = vector.shape_cast %3 : vector<128xf32> to vector<1x1x128xf32>
    %5 = vector.shape_cast %0 : vector<3x4xf32> to vector<3x4x1xf32>
    %6 = vector.broadcast %4 : vector<1x1x128xf32> to vector<3x4x128xf32>
    %7 = vector.broadcast %5 : vector<3x4x1xf32> to vector<3x4x128xf32>
    %8 = arith.subf %6, %7 : vector<3x4x128xf32>
    %9 = vector.shape_cast %1 : vector<3x4xf32> to vector<3x4x1xf32>
    %10 = vector.broadcast %9 : vector<3x4x1xf32> to vector<3x4x128xf32>
    %11 = arith.mulf %8, %10 : vector<3x4x128xf32>
    %12 = arith.mulf %11, %11 : vector<3x4x128xf32>
    %cst = arith.constant 1.000000e+00 : f32
    %13 = vector.broadcast %cst : f32 to vector<3x4x128xf32>
    %14 = arith.addf %13, %12 : vector<3x4x128xf32>
    %cst_5 = arith.constant 5.000000e-01 : f32
    %15 = vector.broadcast %cst_5 : f32 to vector<3x4x128xf32>
    %16 = arith.divf %15, %14 : vector<3x4x128xf32>
    %c0_6 = arith.constant 0 : index
    %c0_7 = arith.constant 0 : index
    %c0_8 = arith.constant 0 : index
    %17 = vector.load %arg4[%c0_6, %c0_7, %c0_8] : memref<3x4x128xf32, #tpu.memory_space<vmem>>, vector<3x4x128xf32>
    tpu.vector_store %arg4[%c0_6, %c0_7, %c0_8], %16 {strides = array<i32>} : memref<3x4x128xf32, #tpu.memory_space<vmem>>, vector<3x4x128xf32>,
    return
  }
  func.func @transform_0(%arg0: i32) -> (i32, i32) {
    %c0_i32 = arith.constant 0 : i32
    %c0_i32_0 = arith.constant 0 : i32
    %c0_i32_1 = arith.constant 0 : i32
    return %c0_i32, %c0_i32_0 : i32, i32
  }
  func.func @transform_1(%arg0: i32) -> (i32, i32) {
    %c0_i32 = arith.constant 0 : i32
    %c0_i32_0 = arith.constant 0 : i32
    %c0_i32_1 = arith.constant 0 : i32
    return %c0_i32, %c0_i32_0 : i32, i32
  }
  func.func @transform_2(%arg0: i32) -> (i32, i32) {
    %c0_i32 = arith.constant 0 : i32
    %c0_i32_0 = arith.constant 0 : i32
    return %c0_i32, %arg0 : i32, i32
  }
  func.func @transform_3(%arg0: i32) -> (i32, i32, i32) {
    %c0_i32 = arith.constant 0 : i32
    %c0_i32_0 = arith.constant 0 : i32
    %c0_i32_1 = arith.constant 0 : i32
    return %c0_i32, %c0_i32_0, %arg0 : i32, i32, i32
  }
}

</mosaic_0001>

<llo_original>
// kernel: tpu_custom_call.1
$region0: #{tpu_custom_call.1}
  #allocation0 [shape = 'u32[]', space=smem, size = 0x4, offset = 0x4, fixed_abs, tag = 'smem constant byte address 0x4 - core index']
  #allocation1 [shape = 'u32[144,128]{1,0:T(1,128)}', space=vmem, size = 0x12000, scoped, tag = 'internal scratch']
  %s0 = inlined_call_operand.hbm [shape: f32[3,4], index: 0, kind: input, shape index: {}]
  %s1 = inlined_call_operand.hbm [shape: f32[3,4], index: 1, kind: input, shape index: {}]
  %s2 = inlined_call_operand.vmem [shape: f32[1,128], index: 2, kind: input, shape index: {}]
  %s3 = inlined_call_operand.hbm [shape: f32[3,4,128], index: 3, kind: output, shape index: {}]
  %s4 = sld [smem:[#allocation0]]
  $region30: #{tpu_custom_call.1} parent=0
    _
  %s6 = ssub.s32 1, %s4
  %s7 = scalar_select 0, %s6, %s4
  $region1: #{tpu_custom_call.1} parent=0
    #allocation2 [shape = 'u8[2048]{0}', space=vmem, size = 0x800, scoped, tag = 'input window, operand 0, single buffered']
    #allocation3 [shape = 's32[1]{0}', space=sflag, size = 0x4, scoped, tag = 'scoped memory for tpu_custom_call.1']
    #allocation4 [shape = 's32[1]{0}', space=sflag, size = 0x4, scoped, tag = 'scoped memory for tpu_custom_call.1']
    #allocation5 [shape = 'u8[2048]{0}', space=vmem, size = 0x800, scoped, tag = 'input window, operand 1, single buffered']
    #allocation6 [shape = 's32[1]{0}', space=sflag, size = 0x4, scoped, tag = 'scoped memory for tpu_custom_call.1']
    #allocation7 [shape = 'u8[6144]{0}', space=vmem, size = 0x1800, scoped, tag = 'output window, operand 0, single buffered']
    %8 = vsyncpa [#allocation3], 0
    %9 = vsyncpa [#allocation6], 0
    %10 = vsyncpa [#allocation4], 0
    // Predicated region
    $region2: #{tpu_custom_call.1} parent=1 // pred_check
      _
    $region3: #{tpu_custom_call.1} parent=1 // pred_check_branch
      %12 = sbr.rel (0) target = $region5
    $region4: #{tpu_custom_call.1} parent=1 // pred_region
      %s14 = ssub.s32 64, 64
      %15 = vsyncadd [#allocation3], %s14
      %s17 = sshll.u32 [#allocation2], 4
      %s18 = int_to_ptr.vmem [resolvable:$true] %s17
      %20 = dma.hbm_to_vmem [thread:$0]  %s0, 64, %s18, [#allocation3]
    $region5: #{tpu_custom_call.1} parent=1 // pred_fallthru
      _
    // Predicated region
    $region6: #{tpu_custom_call.1} parent=1 // pred_check
      _
    $region7: #{tpu_custom_call.1} parent=1 // pred_check_branch
      %22 = sbr.rel (0) target = $region9
    $region8: #{tpu_custom_call.1} parent=1 // pred_region
      %s24 = ssub.s32 64, 64
      %25 = vsyncadd [#allocation6], %s24
      %s27 = sshll.u32 [#allocation5], 4
      %s28 = int_to_ptr.vmem [resolvable:$true] %s27
      %30 = dma.hbm_to_vmem [thread:$0]  %s1, 64, %s28, [#allocation6]
    $region9: #{tpu_custom_call.1} parent=1 // pred_fallthru
      _
    // Predicated region
    $region10: #{tpu_custom_call.1} parent=1 // pred_check
      _
    $region11: #{tpu_custom_call.1} parent=1 // pred_check_branch
      %32 = sbr.rel (0) target = $region13
    $region12: #{tpu_custom_call.1} parent=1 // pred_region
      _
    $region13: #{tpu_custom_call.1} parent=1 // pred_fallthru
      _
    // Predicated region
    $region14: #{tpu_custom_call.1} parent=1 // pred_check
      _
    $region15: #{tpu_custom_call.1} parent=1 // pred_check_branch
      %34 = sbr.rel (0) target = $region17
    $region16: #{tpu_custom_call.1} parent=1 // pred_region
      %35 = dma.done [#allocation3], 64
    $region17: #{tpu_custom_call.1} parent=1 // pred_fallthru
      _
    // Predicated region
    $region18: #{tpu_custom_call.1} parent=1 // pred_check
      _
    $region19: #{tpu_custom_call.1} parent=1 // pred_check_branch
      %37 = sbr.rel (0) target = $region21
    $region20: #{tpu_custom_call.1} parent=1 // pred_region
      %38 = dma.done [#allocation6], 64
    $region21: #{tpu_custom_call.1} parent=1 // pred_fallthru
      _
    %v39 = vld [vmem:[#allocation2] sm:$0x7]
    %v40 = vld [vmem:[#allocation5] sm:$0x7]
    %v41 = vld [vmem:[%s2] sm:$0x1]
    %v42 = vlaneseq
    %v43 = vshrl.u32 %v42, 7
    %v44 = vsub.s32 0, %v43
    %v45 = vrot.slane %v39, %v44
    %47 = vbcast.lane.b32.xlu0 %v45, 256
    %v48 = vpop.permute.xlu0 %47
    %v49 = vlaneseq
    %v50 = vshrl.u32 %v49, 7
    %v51 = vsub.s32 1, %v50
    %v52 = vrot.slane %v39, %v51
    %54 = vbcast.lane.b32.xlu0 %v52, 256
    %v55 = vpop.permute.xlu0 %54
    %v56 = vlaneseq
    %v57 = vshrl.u32 %v56, 7
    %v58 = vsub.s32 2, %v57
    %v59 = vrot.slane %v39, %v58
    %61 = vbcast.lane.b32.xlu0 %v59, 256
    %v62 = vpop.permute.xlu0 %61
    %v64 = vlaneseq
    %v65 = vshrl.u32 %v64, 7
    %v66 = vsub.s32 0, %v65
    %v67 = vrot.slane %v41, %v66
    %v69 = vsub.f32 %v67, %v48
    %v70 = vsub.f32 %v67, %v55
    %v71 = vsub.f32 %v67, %v62
    %v72 = vlaneseq
    %v73 = vshrl.u32 %v72, 7
    %v74 = vsub.s32 0, %v73
    %v75 = vrot.slane %v40, %v74
    %77 = vbcast.lane.b32.xlu0 %v75, 256
    %v78 = vpop.permute.xlu0 %77
    %v79 = vlaneseq
    %v80 = vshrl.u32 %v79, 7
    %v81 = vsub.s32 1, %v80
    %v82 = vrot.slane %v40, %v81
    %84 = vbcast.lane.b32.xlu0 %v82, 256
    %v85 = vpop.permute.xlu0 %84
    %v86 = vlaneseq
    %v87 = vshrl.u32 %v86, 7
    %v88 = vsub.s32 2, %v87
    %v89 = vrot.slane %v40, %v88
    %91 = vbcast.lane.b32.xlu0 %v89, 256
    %v92 = vpop.permute.xlu0 %91
    %v93 = vmul.f32 %v69, %v78
    %v94 = vmul.f32 %v70, %v85
    %v95 = vmul.f32 %v71, %v92
    %v96 = vmul.f32 %v93, %v93
    %v97 = vmul.f32 %v94, %v94
    %v98 = vmul.f32 %v95, %v95
    %v99 = vadd.f32 %v96, 1.0
    %v100 = vadd.f32 %v97, 1.0
    %v101 = vadd.f32 %v98, 1.0
    %v102 = vrcp.pop %v99
    %v103 = vmul.f32 0.5, %v102
    %v104 = vrcp.pop %v100
    %v105 = vmul.f32 0.5, %v104
    %v106 = vrcp.pop %v101
    %v107 = vmul.f32 0.5, %v106
    %108 = vst [vmem:[#allocation7] sm:$0xf] %v103
    %109 = vst [vmem:[#allocation7 + $0x4] sm:$0xf] %v105
    %110 = vst [vmem:[#allocation7 + $0x8] sm:$0xf] %v107
    // Predicated region
    $region22: #{tpu_custom_call.1} parent=1 // pred_check
      _
    $region23: #{tpu_custom_call.1} parent=1 // pred_check_branch
      %112 = sbr.rel (0) target = $region25
    $region24: #{tpu_custom_call.1} parent=1 // pred_region
      %s114 = ssub.s32 192, 192
      %115 = vsyncadd [#allocation4], %s114
      %s116 = sshll.u32 [#allocation7], 4
      %s117 = int_to_ptr.vmem [resolvable:$true] %s116
      %122 = dma.vmem_to_hbm [thread:$0]  %s117, 192, %s3, [#allocation4], 64, 64, 4
    $region25: #{tpu_custom_call.1} parent=1 // pred_fallthru
      _
    // Predicated region
    $region26: #{tpu_custom_call.1} parent=1 // pred_check
      _
    $region27: #{tpu_custom_call.1} parent=1 // pred_check_branch
      %124 = sbr.rel (0) target = $region29
    $region28: #{tpu_custom_call.1} parent=1 // pred_region
      %125 = dma.done [#allocation4], 192
    $region29: #{tpu_custom_call.1} parent=1 // pred_fallthru
      _
    %126 = vsyncpa [#allocation3], 1
    %127 = vsyncpa [#allocation6], 1
    %128 = vsyncpa [#allocation4], 1

</llo_original>
